<compile_context>
chip_gen: v7x
topology: tpu7x:2x2x1
jax: 0.10.0
libtpu: 0.0.40
codegen_flags: <defaults>
</compile_context>

<pallas_src>
import math
from functools import partial

import jax
import jax.numpy as jnp
from jax import lax
from jax.experimental import pallas as pl
from jax.experimental.pallas import tpu as pltpu


def _msa_kernel(inp1_ref, inp2_ref, wq_ref, wkv_ref, bias_ref, out_ref, *,
                nhead, head_dim):
    # Block shapes (grid = (B,)):
    #   inp1_ref : (1, L1, nhid)    bf16, current batch
    #   inp2_ref : (1, L2, nhid)    bf16, current batch
    #   wq_ref   : (nhid, NH*HD)    bf16, 1/sqrt(H) already folded in
    #   wkv_ref  : (nhid, 2*NH*HD)  bf16, [WK.T | WV.T]
    #   bias_ref : (1, 1, L2)       f32 additive mask (-1e8 on masked keys)
    #   out_ref  : (1, L1, NH*HD)   final layout, single lane-dense store
    nhhd = nhead * head_dim

    x1 = inp1_ref[0]            # (L1, nhid)
    x2 = inp2_ref[0]            # (L2, nhid)

    # Fused projections: one MXU push for Q, one for K|V (f32 accumulation).
    q = jnp.dot(x1, wq_ref[...], preferred_element_type=jnp.float32)     # (L1, NH*HD)
    kv = jnp.dot(x2, wkv_ref[...], preferred_element_type=jnp.float32)   # (L2, 2*NH*HD)
    k = kv[:, :nhhd]
    v = kv[:, nhhd:]

    bias = bias_ref[0]          # (1, L2), broadcasts over L1

    q_b = q.astype(jnp.bfloat16)
    k_b = k.astype(jnp.bfloat16)
    v_b = v.astype(jnp.bfloat16)

    head_outs = []
    for h in range(nhead):      # static unroll; NH is small / compile-time
        sl = slice(h * head_dim, (h + 1) * head_dim)
        # scores = q_h @ k_h^T without materializing a transpose.
        scores = lax.dot_general(
            q_b[:, sl], k_b[:, sl],
            dimension_numbers=(((1,), (1,)), ((), ())),
            preferred_element_type=jnp.float32)                           # (L1, L2)
        scores = scores + bias
        # Softmax in f32.
        # TODO(synk): nn.Dropout(0.1) on alpha is elided (eval-mode identity).
        s_max = jnp.max(scores, axis=-1, keepdims=True)
        e = jnp.exp(scores - s_max)
        denom = jnp.sum(e, axis=-1, keepdims=True)
        alpha = e * pl.reciprocal(denom, approx=True)
        head_outs.append(
            jnp.dot(alpha.astype(jnp.bfloat16), v_b[:, sl],
                    preferred_element_type=jnp.float32))                  # (L1, HD)

    # One lane-dense store of the final (L1, NH*HD) layout.
    out_ref[0] = jnp.concatenate(head_outs, axis=-1).astype(out_ref.dtype)


def prepare_msa_params(wq, wk, wv, *, nhid, compute_dtype=jnp.bfloat16):
    """One-time parameter layout prep (call once, not per forward).

    wq/wk/wv: PyTorch nn.Linear weights, shape (NH*HD, nhid)  (y = x @ W.T).
    Returns:
      wq_t  : (nhid, NH*HD)   with the 1/sqrt(H) scale folded in (H == nhid)
      wkv_t : (nhid, 2*NH*HD) = [WK.T | WV.T]
    """
    scale = 1.0 / math.sqrt(nhid)
    wq_t = (wq.T.astype(jnp.float32) * scale).astype(compute_dtype)
    wkv_t = jnp.concatenate([wk.T, wv.T], axis=1).astype(compute_dtype)
    return wq_t, wkv_t


@partial(jax.jit, static_argnames=("nhead", "head_dim"))
def msa_forward(inp1, inp2, wq_t, wkv_t, mask, *, nhead, head_dim):
    """Pallas implementation of MSA.forward (mode='normal', eval-mode dropout).

    inp1: (B, L1, nhid) or (B, nhid)
    inp2: (B, L2, nhid)
    wq_t, wkv_t: outputs of prepare_msa_params
    mask: (B, L2) bool (True = masked out) or None
    """
    squeeze_out = inp1.ndim == 2
    if squeeze_out:
        inp1 = inp1[:, None, :]

    B, L1, _ = inp1.shape
    _, L2, nhid = inp2.shape
    nhhd = nhead * head_dim

    if mask is None:
        bias = jnp.zeros((B, 1, L2), dtype=jnp.float32)
    else:
        bias = jnp.where(mask.reshape(B, 1, L2),
                         jnp.float32(-100000000.0), jnp.float32(0.0))

    cdt = wq_t.dtype

    out = pl.pallas_call(
        partial(_msa_kernel, nhead=nhead, head_dim=head_dim),
        out_shape=jax.ShapeDtypeStruct((B, L1, nhhd), jnp.float32),
        grid_spec=pltpu.PrefetchScalarGridSpec(
            num_scalar_prefetch=0,
            grid=(B,),
            in_specs=[
                pl.BlockSpec((1, L1, nhid), lambda b: (b, 0, 0)),     # inp1
                pl.BlockSpec((1, L2, nhid), lambda b: (b, 0, 0)),     # inp2
                pl.BlockSpec((nhid, nhhd), lambda b: (0, 0)),         # WQ^T (scaled)
                pl.BlockSpec((nhid, 2 * nhhd), lambda b: (0, 0)),     # [WK^T | WV^T]
                pl.BlockSpec((1, 1, L2), lambda b: (b, 0, 0)),        # additive mask
            ],
            out_specs=pl.BlockSpec((1, L1, nhhd), lambda b: (b, 0, 0)),
        ),
        compiler_params=pltpu.CompilerParams(
            dimension_semantics=("parallel",),
        ),
    )(inp1.astype(cdt), inp2.astype(cdt), wq_t, wkv_t, bias)

    if squeeze_out:
        out = out[:, 0, :]
    return out


def _reference(inp1, inp2, wq, wk, wv, mask, nhead, head_dim):
    """Plain-JAX f32 replica of the PyTorch forward, for verification."""
    squeeze_out = inp1.ndim == 2
    if squeeze_out:
        inp1 = inp1[:, None, :]
    B, L2, H = inp2.shape
    L1 = inp1.shape[1]
    NH, HD = nhead, head_dim
    q = inp1 @ wq.T
    k = inp2 @ wk.T
    v = inp2 @ wv.T
    q = q / math.sqrt(H)
    q = q.reshape(B, L1, NH, HD).transpose(0, 2, 1, 3)
    k = k.reshape(B, L2, NH, HD).transpose(0, 2, 3, 1)
    v = v.reshape(B, L2, NH, HD).transpose(0, 2, 1, 3)
    pre = jnp.matmul(q, k)
    if mask is not None:
        pre = jnp.where(mask[:, None, None, :], -100000000.0, pre)
    alpha = jax.nn.softmax(pre, axis=-1)
    attn = jnp.matmul(alpha, v).transpose(0, 2, 1, 3).reshape(B, L1, NH * HD)
    if squeeze_out:
        attn = attn[:, 0, :]
    return attn


if __name__ == "__main__":
    # config: nhid=32, nhead=4, head_dim=8
    B, L1, L2, NHID, NHEAD, HEAD_DIM = 2, 8, 8, 32, 4, 8

    key = jax.random.PRNGKey(0)
    k1, k2, k3, k4, k5, k6 = jax.random.split(key, 6)

    inp1 = jax.random.normal(k1, (B, L1, NHID), dtype=jnp.float32)
    inp2 = jax.random.normal(k2, (B, L2, NHID), dtype=jnp.float32)

    # Deterministic synthetic parameters (PyTorch Linear layout: (out, in)).
    bound = 1.0 / math.sqrt(NHID)
    wq = jax.random.uniform(k3, (NHEAD * HEAD_DIM, NHID), jnp.float32, -bound, bound)
    wk = jax.random.uniform(k4, (NHEAD * HEAD_DIM, NHID), jnp.float32, -bound, bound)
    wv = jax.random.uniform(k5, (NHEAD * HEAD_DIM, NHID), jnp.float32, -bound, bound)

    # Boolean key-padding mask over L2 (True = masked out); keep col 0 valid.
    mask = jax.random.bernoulli(k6, 0.25, (B, L2))
    mask = mask.at[:, 0].set(False)

    # One-time parameter prep (layout transform + scale fold), not per call.
    wq_t, wkv_t = prepare_msa_params(wq, wk, wv, nhid=NHID)

    out = msa_forward(inp1, inp2, wq_t, wkv_t, mask,
                      nhead=NHEAD, head_dim=HEAD_DIM)
    out = jax.block_until_ready(out)

    ref = _reference(inp1, inp2, wq, wk, wv, mask, NHEAD, HEAD_DIM)
    assert out.shape == (B, L1, NHEAD * HEAD_DIM)
    max_err = float(jnp.max(jnp.abs(out - ref)))
    # bf16 MXU operands + approx reciprocal => loosen tolerance vs f32 ref.
    assert max_err < 2e-2, f"mismatch vs reference: max abs err {max_err}"

    print("KERNEL_OK")
</pallas_src>

<mosaic_0001>
module attributes {stable_mosaic.version = 11 : i64} {
  func.func @_msa_kernel(%arg0: i32, %arg1: memref<1x8x32xbf16, #tpu.memory_space<vmem>>, %arg2: memref<1x8x32xbf16, #tpu.memory_space<vmem>>, %arg3: memref<32x32xbf16, #tpu.memory_space<vmem>>, %arg4: memref<32x64xbf16, #tpu.memory_space<vmem>>, %arg5: memref<1x1x8xf32, #tpu.memory_space<vmem>>, %arg6: memref<1x8x32xf32, #tpu.memory_space<vmem>>) attributes {dimension_semantics = [#tpu.dimension_semantics<parallel>], iteration_bounds = array<i64: 2>, scalar_prefetch = 0 : i64, scratch_operands = 0 : i64, tpu.core_type = #tpu.core_type<tc>, window_params = [{transform_indices = @transform_0, window_bounds = array<i64: 1, 8, 32>}, {transform_indices = @transform_1, window_bounds = array<i64: 1, 8, 32>}, {pipeline_mode = #tpu.pipeline_mode<synchronous>, transform_indices = @transform_2, window_bounds = array<i64: 32, 32>}, {pipeline_mode = #tpu.pipeline_mode<synchronous>, transform_indices = @transform_3, window_bounds = array<i64: 32, 64>}, {transform_indices = @transform_4, window_bounds = array<i64: 1, 1, 8>}, {transform_indices = @transform_5, window_bounds = array<i64: 1, 8, 32>}]} {
    %c0 = arith.constant 0 : index
    %c0_0 = arith.constant 0 : index
    %c0_1 = arith.constant 0 : index
    %0 = vector.load %arg1[%c0, %c0_0, %c0_1] : memref<1x8x32xbf16, #tpu.memory_space<vmem>>, vector<1x8x32xbf16>
    %1 = vector.shape_cast %0 : vector<1x8x32xbf16> to vector<8x32xbf16>
    %c0_2 = arith.constant 0 : index
    %c0_3 = arith.constant 0 : index
    %c0_4 = arith.constant 0 : index
    %2 = vector.load %arg2[%c0_2, %c0_3, %c0_4] : memref<1x8x32xbf16, #tpu.memory_space<vmem>>, vector<1x8x32xbf16>
    %3 = vector.shape_cast %2 : vector<1x8x32xbf16> to vector<8x32xbf16>
    %c0_5 = arith.constant 0 : index
    %c0_6 = arith.constant 0 : index
    %4 = vector.load %arg3[%c0_5, %c0_6] : memref<32x32xbf16, #tpu.memory_space<vmem>>, vector<32x32xbf16>
    %cst = arith.constant dense<0.000000e+00> : vector<8x32xf32>
    %5 = tpu.matmul %1, %4, %cst {dimension_numbers = #tpu.dot_dimension_numbers<[1], [0], [0], [1], [0, 0, 1, 1], [], []>} : vector<8x32xbf16>, vector<32x32xbf16>, vector<8x32xf32> -> vector<8x32xf32>
    %c0_7 = arith.constant 0 : index
    %c0_8 = arith.constant 0 : index
    %6 = vector.load %arg4[%c0_7, %c0_8] : memref<32x64xbf16, #tpu.memory_space<vmem>>, vector<32x64xbf16>
    %cst_9 = arith.constant dense<0.000000e+00> : vector<8x64xf32>
    %7 = tpu.matmul %3, %6, %cst_9 {dimension_numbers = #tpu.dot_dimension_numbers<[1], [0], [0], [1], [0, 0, 1, 1], [], []>} : vector<8x32xbf16>, vector<32x64xbf16>, vector<8x64xf32> -> vector<8x64xf32>
    %8 = vector.extract_strided_slice %7 {offsets = [0, 0], sizes = [8, 32], strides = [1, 1]} : vector<8x64xf32> to vector<8x32xf32>
    %9 = vector.extract_strided_slice %7 {offsets = [0, 32], sizes = [8, 32], strides = [1, 1]} : vector<8x64xf32> to vector<8x32xf32>
    %c0_10 = arith.constant 0 : index
    %c0_11 = arith.constant 0 : index
    %c0_12 = arith.constant 0 : index
    %10 = vector.load %arg5[%c0_10, %c0_11, %c0_12] : memref<1x1x8xf32, #tpu.memory_space<vmem>>, vector<1x1x8xf32>
    %11 = vector.shape_cast %10 : vector<1x1x8xf32> to vector<1x8xf32>
    %12 = arith.truncf %5 : vector<8x32xf32> to vector<8x32xbf16>
    %13 = arith.truncf %8 : vector<8x32xf32> to vector<8x32xbf16>
    %14 = arith.truncf %9 : vector<8x32xf32> to vector<8x32xbf16>
    %15 = vector.extract_strided_slice %12 {offsets = [0, 0], sizes = [8, 8], strides = [1, 1]} : vector<8x32xbf16> to vector<8x8xbf16>
    %16 = vector.extract_strided_slice %13 {offsets = [0, 0], sizes = [8, 8], strides = [1, 1]} : vector<8x32xbf16> to vector<8x8xbf16>
    %cst_13 = arith.constant dense<0.000000e+00> : vector<8x8xf32>
    %17 = tpu.matmul %15, %16, %cst_13 {dimension_numbers = #tpu.dot_dimension_numbers<[1], [1], [0], [0], [0, 0, 1, 0], [], []>} : vector<8x8xbf16>, vector<8x8xbf16>, vector<8x8xf32> -> vector<8x8xf32>
    %18 = vector.broadcast %11 : vector<1x8xf32> to vector<8x8xf32>
    %19 = arith.addf %17, %18 : vector<8x8xf32>
    %cst_14 = arith.constant dense<0xFF800000> : vector<8xf32>
    %20 = vector.multi_reduction <maximumf>, %19, %cst_14 [1] : vector<8x8xf32> to vector<8xf32>
    %21 = vector.shape_cast %20 : vector<8xf32> to vector<8x1xf32>
    %22 = vector.broadcast %21 : vector<8x1xf32> to vector<8x8xf32>
    %23 = arith.subf %19, %22 : vector<8x8xf32>
    %24 = math.exp %23 : vector<8x8xf32>
    %cst_15 = arith.constant dense<0.000000e+00> : vector<8xf32>
    %25 = vector.multi_reduction <add>, %24, %cst_15 [1] : vector<8x8xf32> to vector<8xf32>
    %26 = vector.shape_cast %25 : vector<8xf32> to vector<8x1xf32>
    %27 = tpu.reciprocal %26 {approx = true} : vector<8x1xf32> -> vector<8x1xf32>
    %28 = vector.broadcast %27 : vector<8x1xf32> to vector<8x8xf32>
    %29 = arith.mulf %24, %28 : vector<8x8xf32>
    %30 = arith.truncf %29 : vector<8x8xf32> to vector<8x8xbf16>
    %31 = vector.extract_strided_slice %14 {offsets = [0, 0], sizes = [8, 8], strides = [1, 1]} : vector<8x32xbf16> to vector<8x8xbf16>
    %cst_16 = arith.constant dense<0.000000e+00> : vector<8x8xf32>
    %32 = tpu.matmul %30, %31, %cst_16 {dimension_numbers = #tpu.dot_dimension_numbers<[1], [0], [0], [1], [0, 0, 1, 1], [], []>} : vector<8x8xbf16>, vector<8x8xbf16>, vector<8x8xf32> -> vector<8x8xf32>
    %33 = vector.extract_strided_slice %12 {offsets = [0, 8], sizes = [8, 8], strides = [1, 1]} : vector<8x32xbf16> to vector<8x8xbf16>
    %34 = vector.extract_strided_slice %13 {offsets = [0, 8], sizes = [8, 8], strides = [1, 1]} : vector<8x32xbf16> to vector<8x8xbf16>
    %cst_17 = arith.constant dense<0.000000e+00> : vector<8x8xf32>
    %35 = tpu.matmul %33, %34, %cst_17 {dimension_numbers = #tpu.dot_dimension_numbers<[1], [1], [0], [0], [0, 0, 1, 0], [], []>} : vector<8x8xbf16>, vector<8x8xbf16>, vector<8x8xf32> -> vector<8x8xf32>
    %36 = vector.broadcast %11 : vector<1x8xf32> to vector<8x8xf32>
    %37 = arith.addf %35, %36 : vector<8x8xf32>
    %cst_18 = arith.constant dense<0xFF800000> : vector<8xf32>
    %38 = vector.multi_reduction <maximumf>, %37, %cst_18 [1] : vector<8x8xf32> to vector<8xf32>
    %39 = vector.shape_cast %38 : vector<8xf32> to vector<8x1xf32>
    %40 = vector.broadcast %39 : vector<8x1xf32> to vector<8x8xf32>
    %41 = arith.subf %37, %40 : vector<8x8xf32>
    %42 = math.exp %41 : vector<8x8xf32>
    %cst_19 = arith.constant dense<0.000000e+00> : vector<8xf32>
    %43 = vector.multi_reduction <add>, %42, %cst_19 [1] : vector<8x8xf32> to vector<8xf32>
    %44 = vector.shape_cast %43 : vector<8xf32> to vector<8x1xf32>
    %45 = tpu.reciprocal %44 {approx = true} : vector<8x1xf32> -> vector<8x1xf32>
    %46 = vector.broadcast %45 : vector<8x1xf32> to vector<8x8xf32>
    %47 = arith.mulf %42, %46 : vector<8x8xf32>
    %48 = arith.truncf %47 : vector<8x8xf32> to vector<8x8xbf16>
    %49 = vector.extract_strided_slice %14 {offsets = [0, 8], sizes = [8, 8], strides = [1, 1]} : vector<8x32xbf16> to vector<8x8xbf16>
    %cst_20 = arith.constant dense<0.000000e+00> : vector<8x8xf32>
    %50 = tpu.matmul %48, %49, %cst_20 {dimension_numbers = #tpu.dot_dimension_numbers<[1], [0], [0], [1], [0, 0, 1, 1], [], []>} : vector<8x8xbf16>, vector<8x8xbf16>, vector<8x8xf32> -> vector<8x8xf32>
    %51 = vector.extract_strided_slice %12 {offsets = [0, 16], sizes = [8, 8], strides = [1, 1]} : vector<8x32xbf16> to vector<8x8xbf16>
    %52 = vector.extract_strided_slice %13 {offsets = [0, 16], sizes = [8, 8], strides = [1, 1]} : vector<8x32xbf16> to vector<8x8xbf16>
    %cst_21 = arith.constant dense<0.000000e+00> : vector<8x8xf32>
    %53 = tpu.matmul %51, %52, %cst_21 {dimension_numbers = #tpu.dot_dimension_numbers<[1], [1], [0], [0], [0, 0, 1, 0], [], []>} : vector<8x8xbf16>, vector<8x8xbf16>, vector<8x8xf32> -> vector<8x8xf32>
    %54 = vector.broadcast %11 : vector<1x8xf32> to vector<8x8xf32>
    %55 = arith.addf %53, %54 : vector<8x8xf32>
    %cst_22 = arith.constant dense<0xFF800000> : vector<8xf32>
    %56 = vector.multi_reduction <maximumf>, %55, %cst_22 [1] : vector<8x8xf32> to vector<8xf32>
    %57 = vector.shape_cast %56 : vector<8xf32> to vector<8x1xf32>
    %58 = vector.broadcast %57 : vector<8x1xf32> to vector<8x8xf32>
    %59 = arith.subf %55, %58 : vector<8x8xf32>
    %60 = math.exp %59 : vector<8x8xf32>
    %cst_23 = arith.constant dense<0.000000e+00> : vector<8xf32>
    %61 = vector.multi_reduction <add>, %60, %cst_23 [1] : vector<8x8xf32> to vector<8xf32>
    %62 = vector.shape_cast %61 : vector<8xf32> to vector<8x1xf32>
    %63 = tpu.reciprocal %62 {approx = true} : vector<8x1xf32> -> vector<8x1xf32>
    %64 = vector.broadcast %63 : vector<8x1xf32> to vector<8x8xf32>
    %65 = arith.mulf %60, %64 : vector<8x8xf32>
    %66 = arith.truncf %65 : vector<8x8xf32> to vector<8x8xbf16>
    %67 = vector.extract_strided_slice %14 {offsets = [0, 16], sizes = [8, 8], strides = [1, 1]} : vector<8x32xbf16> to vector<8x8xbf16>
    %cst_24 = arith.constant dense<0.000000e+00> : vector<8x8xf32>
    %68 = tpu.matmul %66, %67, %cst_24 {dimension_numbers = #tpu.dot_dimension_numbers<[1], [0], [0], [1], [0, 0, 1, 1], [], []>} : vector<8x8xbf16>, vector<8x8xbf16>, vector<8x8xf32> -> vector<8x8xf32>
    %69 = vector.extract_strided_slice %12 {offsets = [0, 24], sizes = [8, 8], strides = [1, 1]} : vector<8x32xbf16> to vector<8x8xbf16>
    %70 = vector.extract_strided_slice %13 {offsets = [0, 24], sizes = [8, 8], strides = [1, 1]} : vector<8x32xbf16> to vector<8x8xbf16>
    %cst_25 = arith.constant dense<0.000000e+00> : vector<8x8xf32>
    %71 = tpu.matmul %69, %70, %cst_25 {dimension_numbers = #tpu.dot_dimension_numbers<[1], [1], [0], [0], [0, 0, 1, 0], [], []>} : vector<8x8xbf16>, vector<8x8xbf16>, vector<8x8xf32> -> vector<8x8xf32>
    %72 = vector.broadcast %11 : vector<1x8xf32> to vector<8x8xf32>
    %73 = arith.addf %71, %72 : vector<8x8xf32>
    %cst_26 = arith.constant dense<0xFF800000> : vector<8xf32>
    %74 = vector.multi_reduction <maximumf>, %73, %cst_26 [1] : vector<8x8xf32> to vector<8xf32>
    %75 = vector.shape_cast %74 : vector<8xf32> to vector<8x1xf32>
    %76 = vector.broadcast %75 : vector<8x1xf32> to vector<8x8xf32>
    %77 = arith.subf %73, %76 : vector<8x8xf32>
    %78 = math.exp %77 : vector<8x8xf32>
    %cst_27 = arith.constant dense<0.000000e+00> : vector<8xf32>
    %79 = vector.multi_reduction <add>, %78, %cst_27 [1] : vector<8x8xf32> to vector<8xf32>
    %80 = vector.shape_cast %79 : vector<8xf32> to vector<8x1xf32>
    %81 = tpu.reciprocal %80 {approx = true} : vector<8x1xf32> -> vector<8x1xf32>
    %82 = vector.broadcast %81 : vector<8x1xf32> to vector<8x8xf32>
    %83 = arith.mulf %78, %82 : vector<8x8xf32>
    %84 = arith.truncf %83 : vector<8x8xf32> to vector<8x8xbf16>
    %85 = vector.extract_strided_slice %14 {offsets = [0, 24], sizes = [8, 8], strides = [1, 1]} : vector<8x32xbf16> to vector<8x8xbf16>
    %cst_28 = arith.constant dense<0.000000e+00> : vector<8x8xf32>
    %86 = tpu.matmul %84, %85, %cst_28 {dimension_numbers = #tpu.dot_dimension_numbers<[1], [0], [0], [1], [0, 0, 1, 1], [], []>} : vector<8x8xbf16>, vector<8x8xbf16>, vector<8x8xf32> -> vector<8x8xf32>
    %87 = tpu.concatenate %32, %50, %68, %86 in 1 : vector<8x8xf32>, vector<8x8xf32>, vector<8x8xf32>, vector<8x8xf32> -> vector<8x32xf32>
    %c0_29 = arith.constant 0 : index
    %c0_30 = arith.constant 0 : index
    %c0_31 = arith.constant 0 : index
    %88 = vector.load %arg6[%c0_29, %c0_30, %c0_31] : memref<1x8x32xf32, #tpu.memory_space<vmem>>, vector<1x8x32xf32>
    %89 = vector.shape_cast %88 : vector<1x8x32xf32> to vector<8x32xf32>
    %90 = vector.shape_cast %87 : vector<8x32xf32> to vector<1x8x32xf32>
    tpu.vector_store %arg6[%c0_29, %c0_30, %c0_31], %90 {strides = array<i32>} : memref<1x8x32xf32, #tpu.memory_space<vmem>>, vector<1x8x32xf32>,
    return
  }
  func.func @transform_0(%arg0: i32) -> (i32, i32, i32) {
    %c0_i32 = arith.constant 0 : i32
    %c0_i32_0 = arith.constant 0 : i32
    %c0_i32_1 = arith.constant 0 : i32
    return %arg0, %c0_i32, %c0_i32_0 : i32, i32, i32
  }
  func.func @transform_1(%arg0: i32) -> (i32, i32, i32) {
    %c0_i32 = arith.constant 0 : i32
    %c0_i32_0 = arith.constant 0 : i32
    %c0_i32_1 = arith.constant 0 : i32
    return %arg0, %c0_i32, %c0_i32_0 : i32, i32, i32
  }
  func.func @transform_2(%arg0: i32) -> (i32, i32) {
    %c0_i32 = arith.constant 0 : i32
    %c0_i32_0 = arith.constant 0 : i32
    %c0_i32_1 = arith.constant 0 : i32
    return %c0_i32, %c0_i32_0 : i32, i32
  }
  func.func @transform_3(%arg0: i32) -> (i32, i32) {
    %c0_i32 = arith.constant 0 : i32
    %c0_i32_0 = arith.constant 0 : i32
    %c0_i32_1 = arith.constant 0 : i32
    return %c0_i32, %c0_i32_0 : i32, i32
  }
  func.func @transform_4(%arg0: i32) -> (i32, i32, i32) {
    %c0_i32 = arith.constant 0 : i32
    %c0_i32_0 = arith.constant 0 : i32
    %c0_i32_1 = arith.constant 0 : i32
    return %arg0, %c0_i32, %c0_i32_0 : i32, i32, i32
  }
  func.func @transform_5(%arg0: i32) -> (i32, i32, i32) {
    %c0_i32 = arith.constant 0 : i32
    %c0_i32_0 = arith.constant 0 : i32
    %c0_i32_1 = arith.constant 0 : i32
    return %arg0, %c0_i32, %c0_i32_0 : i32, i32, i32
  }
}

</mosaic_0001>

<llo_original>
// kernel: msa_forward.1
$region0: #{msa_forward.1}
  #allocation0 [shape = 'u32[]', space=smem, size = 0x4, offset = 0x4, fixed_abs, tag = 'smem constant byte address 0x4 - core index']
  #allocation1 [shape = 'u32[144,128]{1,0:T(1,128)}', space=vmem, size = 0x12000, scoped, tag = 'internal scratch']
  %s0 = inlined_call_operand.vmem [shape: bf16[2,8,32], index: 0, kind: input, shape index: {}]
  %s1 = inlined_call_operand.vmem [shape: bf16[2,8,32], index: 1, kind: input, shape index: {}]
  %s2 = inlined_call_operand.vmem [shape: bf16[32,32], index: 2, kind: input, shape index: {}]
  %s3 = inlined_call_operand.vmem [shape: bf16[32,64], index: 3, kind: input, shape index: {}]
  %s4 = inlined_call_operand.vmem [shape: f32[2,1,8], index: 4, kind: input, shape index: {}]
  %s5 = inlined_call_operand.hbm [shape: f32[2,8,32], index: 5, kind: output, shape index: {}]
  %s6 = sld [smem:[#allocation0]]
  $region53: #{msa_forward.1} parent=0
    _
  %s8 = ssub.s32 1, %s6
  %s9 = scalar_select 0, %s8, %s6
  $region1: #{msa_forward.1} parent=0
    #allocation2 [shape = 'u8[8192]{0}', space=vmem, size = 0x2000, scoped, tag = 'output window, operand 0']
    #allocation3 [shape = 's32[2]{0}', space=sflag, size = 0x8, scoped, tag = 'scoped memory for msa_forward.1']
    %10 = vsyncpa [#allocation3], 0
    %s11 = scalar_lea.sflag [#allocation3], 1
    %12 = vsyncpa %s11, 0
    loop: start=0, step=1, limit=4
    $region2: #{msa_forward.1} parent=1 // loop_pre_header
      _
    $region3: #{msa_forward.1} parent=1 // loop_header
      %s14 = sphi 0, %s18
      %p15 = scmp.ge.s32.totalorder %s14, 4
      %s24 = sphi 0, %s26
      %s27 = sphi 0, %s24
      %s28 = sphi 0, %s27
      %s44 = sphi 0, %s28
      %s50 = sphi 0, %s52
      %s53 = sphi 0, %s50
      %s54 = sphi 0, %s53
      %s70 = sphi 0, %s54
      %s74 = sphi 0, %s74
      %s76 = sphi 0, %s74
      %s77 = sphi 0, %s76
      %s91 = sphi 0, %s77
      %s95 = sphi 0, %s95
      %s97 = sphi 0, %s95
      %s98 = sphi 0, %s97
      %s112 = sphi 0, %s98
      %s118 = sphi 0, %s120
      %s121 = sphi 0, %s118
      %s122 = sphi 0, %s121
      %s138 = sphi 0, %s122
      %s144 = sphi 0, %s146
      %s147 = sphi 0, %s144
      %s148 = sphi 0, %s147
      %s164 = sphi 0, %s148
    $region4: #{msa_forward.1} parent=1 // loop_header_branch
      %17 = sbr.rel (%p15) target = $region8
    $region5: #{msa_forward.1} parent=1 // loop_body
      %s19 = ssub.s32 %s14, 1
      %s20 = ssub.s32 %s14, 2
      %s21 = sadd.s32 %s14, 1
      %s22 = ssub.s32 %s14, %s21
      %p23 = scmp.eq.s32.totalorder %s22, 0
      %s25 = sadd.s32 %s24, 1
      %s26 = scalar_select %p23, %s24, %s25
      %p29 = pneg %p23
      %p30 = scmp.eq.s32.totalorder %s14, 1
      %p31 = por %p29, %p30
      %p32 = scmp.ne.s32.totalorder %s24, %s27
      %p33 = scmp.eq.s32.totalorder %s14, 0
      %p34 = por %p32, %p33
      %p35 = scmp.ne.s32.totalorder %s24, %s27
      %p36 = scmp.eq.s32.totalorder %s19, 1
      %p37 = por %p35, %p36
      %p38 = scmp.ne.s32.totalorder %s27, %s28
      %p39 = scmp.eq.s32.totalorder %s19, 0
      %p40 = por %p38, %p39
      %p41 = scmp.ne.s32.totalorder %s27, %s28
      %p42 = scmp.eq.s32.totalorder %s20, 1
      %p43 = por %p41, %p42
      %p45 = scmp.ne.s32.totalorder %s28, %s44
      %p46 = scmp.eq.s32.totalorder %s20, 0
      %p47 = por %p45, %p46
      %s48 = ssub.s32 %s14, %s21
      %p49 = scmp.eq.s32.totalorder %s48, 0
      %s51 = sadd.s32 %s50, 1
      %s52 = scalar_select %p49, %s50, %s51
      %p55 = pneg %p49
      %p56 = scmp.eq.s32.totalorder %s14, 1
      %p57 = por %p55, %p56
      %p58 = scmp.ne.s32.totalorder %s50, %s53
      %p59 = scmp.eq.s32.totalorder %s14, 0
      %p60 = por %p58, %p59
      %p61 = scmp.ne.s32.totalorder %s50, %s53
      %p62 = scmp.eq.s32.totalorder %s19, 1
      %p63 = por %p61, %p62
      %p64 = scmp.ne.s32.totalorder %s53, %s54
      %p65 = scmp.eq.s32.totalorder %s19, 0
      %p66 = por %p64, %p65
      %p67 = scmp.ne.s32.totalorder %s53, %s54
      %p68 = scmp.eq.s32.totalorder %s20, 1
      %p69 = por %p67, %p68
      %p71 = scmp.ne.s32.totalorder %s54, %s70
      %p72 = scmp.eq.s32.totalorder %s20, 0
      %p73 = por %p71, %p72
      %s75 = sadd.s32 %s74, 1
      %p78 = scmp.eq.s32.totalorder %s14, 1
      %p79 = scmp.ne.s32.totalorder %s74, %s76
      %p80 = scmp.eq.s32.totalorder %s14, 0
      %p81 = por %p79, %p80
      %p82 = scmp.ne.s32.totalorder %s74, %s76
      %p83 = scmp.eq.s32.totalorder %s19, 1
      %p84 = por %p82, %p83
      %p85 = scmp.ne.s32.totalorder %s76, %s77
      %p86 = scmp.eq.s32.totalorder %s19, 0
      %p87 = por %p85, %p86
      %p88 = scmp.ne.s32.totalorder %s76, %s77
      %p89 = scmp.eq.s32.totalorder %s20, 1
      %p90 = por %p88, %p89
      %p92 = scmp.ne.s32.totalorder %s77, %s91
      %p93 = scmp.eq.s32.totalorder %s20, 0
      %p94 = por %p92, %p93
      %s96 = sadd.s32 %s95, 1
      %p99 = scmp.eq.s32.totalorder %s14, 1
      %p100 = scmp.ne.s32.totalorder %s95, %s97
      %p101 = scmp.eq.s32.totalorder %s14, 0
      %p102 = por %p100, %p101
      %p103 = scmp.ne.s32.totalorder %s95, %s97
      %p104 = scmp.eq.s32.totalorder %s19, 1
      %p105 = por %p103, %p104
      %p106 = scmp.ne.s32.totalorder %s97, %s98
      %p107 = scmp.eq.s32.totalorder %s19, 0
      %p108 = por %p106, %p107
      %p109 = scmp.ne.s32.totalorder %s97, %s98
      %p110 = scmp.eq.s32.totalorder %s20, 1
      %p111 = por %p109, %p110
      %p113 = scmp.ne.s32.totalorder %s98, %s112
      %p114 = scmp.eq.s32.totalorder %s20, 0
      %p115 = por %p113, %p114
      %s116 = ssub.s32 %s14, %s21
      %p117 = scmp.eq.s32.totalorder %s116, 0
      %s119 = sadd.s32 %s118, 1
      %s120 = scalar_select %p117, %s118, %s119
      %p123 = pneg %p117
      %p124 = scmp.eq.s32.totalorder %s14, 1
      %p125 = por %p123, %p124
      %p126 = scmp.ne.s32.totalorder %s118, %s121
      %p127 = scmp.eq.s32.totalorder %s14, 0
      %p128 = por %p126, %p127
      %p129 = scmp.ne.s32.totalorder %s118, %s121
      %p130 = scmp.eq.s32.totalorder %s19, 1
      %p131 = por %p129, %p130
      %p132 = scmp.ne.s32.totalorder %s121, %s122
      %p133 = scmp.eq.s32.totalorder %s19, 0
      %p134 = por %p132, %p133
      %p135 = scmp.ne.s32.totalorder %s121, %s122
      %p136 = scmp.eq.s32.totalorder %s20, 1
      %p137 = por %p135, %p136
      %p139 = scmp.ne.s32.totalorder %s122, %s138
      %p140 = scmp.eq.s32.totalorder %s20, 0
      %p141 = por %p139, %p140
      %s142 = ssub.s32 %s14, %s21
      %p143 = scmp.eq.s32.totalorder %s142, 0
      %s145 = sadd.s32 %s144, 1
      %s146 = scalar_select %p143, %s144, %s145
      %p149 = pneg %p143
      %p150 = scmp.eq.s32.totalorder %s14, 1
      %p151 = por %p149, %p150
      %p152 = scmp.ne.s32.totalorder %s144, %s147
      %p153 = scmp.eq.s32.totalorder %s14, 0
      %p154 = por %p152, %p153
      %p155 = scmp.ne.s32.totalorder %s144, %s147
      %p156 = scmp.eq.s32.totalorder %s19, 1
      %p157 = por %p155, %p156
      %p158 = scmp.ne.s32.totalorder %s147, %s148
      %p159 = scmp.eq.s32.totalorder %s19, 0
      %p160 = por %p158, %p159
      %p161 = scmp.ne.s32.totalorder %s147, %s148
      %p162 = scmp.eq.s32.totalorder %s20, 1
      %p163 = por %p161, %p162
      %p165 = scmp.ne.s32.totalorder %s148, %s164
      %p166 = scmp.eq.s32.totalorder %s20, 0
      %p167 = por %p165, %p166
      %p168 = scmp.le.s32.totalorder 1, %s14
      %p169 = scmp.lt.s32.totalorder %s14, 3
      %p170 = pnand %p168, %p169
      %p171 = pneg %p170
      // Predicated region
      $region9: #{msa_forward.1} parent=5 // pred_check
        _
      $region10: #{msa_forward.1} parent=5 // pred_check_branch
        %173 = sbr.rel (%p170) target = $region12
      $region11: #{msa_forward.1} parent=5 // pred_region
        %s174 = ssub.s32 %s14, 1
        // Predicated region
        $region13: #{msa_forward.1} parent=11 // pred_check
          %p175 = pneg %p87
        $region14: #{msa_forward.1} parent=11 // pred_check_branch
          %177 = sbr.rel (%p175) target = $region16
        $region15: #{msa_forward.1} parent=11 // pred_region
          _
        $region16: #{msa_forward.1} parent=11 // pred_fallthru
          _
        // Predicated region
        $region17: #{msa_forward.1} parent=11 // pred_check
          %p178 = pneg %p108
        $region18: #{msa_forward.1} parent=11 // pred_check_branch
          %180 = sbr.rel (%p178) target = $region20
        $region19: #{msa_forward.1} parent=11 // pred_region
          _
        $region20: #{msa_forward.1} parent=11 // pred_fallthru
          _
      $region12: #{msa_forward.1} parent=5 // pred_fallthru
        _
      %p181 = scmp.lt.s32.totalorder %s14, 2
      // Predicated region
      $region21: #{msa_forward.1} parent=5 // pred_check
        %p182 = pneg %p181
      $region22: #{msa_forward.1} parent=5 // pred_check_branch
        %184 = sbr.rel (%p182) target = $region24
      $region23: #{msa_forward.1} parent=5 // pred_region
        // Predicated region
        $region25: #{msa_forward.1} parent=23 // pred_check
          %p185 = pneg %p34
        $region26: #{msa_forward.1} parent=23 // pred_check_branch
          %187 = sbr.rel (%p185) target = $region28
        $region27: #{msa_forward.1} parent=23 // pred_region
          %p188 = scmp.lt.s32.totalorder %s14, 1
          %s189 = scalar_select %p188, %s14, 1
          %s190 = smul.addr %s189, 4
          %s191 = scalar_lea.vmem %s0, %s190
        $region28: #{msa_forward.1} parent=23 // pred_fallthru
          _
        // Predicated region
        $region29: #{msa_forward.1} parent=23 // pred_check
          %p192 = pneg %p60
        $region30: #{msa_forward.1} parent=23 // pred_check_branch
          %194 = sbr.rel (%p192) target = $region32
        $region31: #{msa_forward.1} parent=23 // pred_region
          %p195 = scmp.lt.s32.totalorder %s14, 1
          %s196 = scalar_select %p195, %s14, 1
          %s197 = smul.addr %s196, 4
          %s198 = scalar_lea.vmem %s1, %s197
        $region32: #{msa_forward.1} parent=23 // pred_fallthru
          _
        // Predicated region
        $region33: #{msa_forward.1} parent=23 // pred_check
          %p199 = pneg %p128
        $region34: #{msa_forward.1} parent=23 // pred_check_branch
          %201 = sbr.rel (%p199) target = $region36
        $region35: #{msa_forward.1} parent=23 // pred_region
          %p202 = scmp.lt.s32.totalorder %s14, 1
          %s203 = scalar_select %p202, %s14, 1
          %s204 = scalar_lea.vmem %s4, %s203
        $region36: #{msa_forward.1} parent=23 // pred_fallthru
          _
      $region24: #{msa_forward.1} parent=5 // pred_fallthru
        _
      %p205 = scmp.le.s32.totalorder 1, %s14
      %p206 = scmp.lt.s32.totalorder %s14, 3
      %p207 = pnand %p205, %p206
      %p208 = pneg %p207
      // Predicated region
      $region37: #{msa_forward.1} parent=5 // pred_check
        _
      $region38: #{msa_forward.1} parent=5 // pred_check_branch
        %210 = sbr.rel (%p207) target = $region40
      $region39: #{msa_forward.1} parent=5 // pred_region
        %s211 = ssub.s32 %s14, 1
        %p212 = scmp.lt.s32.totalorder %s19, 1
        %s213 = scalar_select %p212, %s19, 1
        %s214 = smul.addr %s213, 4
        %s215 = scalar_lea.vmem %s0, %s214
        %p216 = pneg %p40
        %p217 = pneg %p37
        %p218 = scmp.lt.s32.totalorder %s19, 1
        %s219 = scalar_select %p218, %s19, 1
        %s220 = smul.addr %s219, 4
        %s221 = scalar_lea.vmem %s1, %s220
        %p222 = pneg %p66
        %p223 = pneg %p63
        %p224 = pneg %p87
        %p225 = pneg %p84
        %p226 = pneg %p108
        %p227 = pneg %p105
        %p228 = scmp.lt.s32.totalorder %s19, 1
        %s229 = scalar_select %p228, %s19, 1
        %s230 = scalar_lea.vmem %s4, %s229
        %p231 = pneg %p134
        %p232 = pneg %p131
        %p233 = pneg %p160
        %p234 = pneg %p157
        %s235 = sand.u32 %s147, 1
        %s236 = scalar_lea.sflag [#allocation3], %s235
        %s237 = sand.u32 %s147, 1
        %s238 = smul.addr %s237, 8
        %s239 = scalar_lea.vmem [#allocation2], %s238
        %p240 = scmp.lt.s32.totalorder %s19, 1
        %s241 = scalar_select %p240, %s19, 1
        %s242 = smul.addr %s241, 4
        %s243 = scalar_lea.vmem %s0, %s242
        %p244 = scmp.lt.s32.totalorder %s19, 1
        %s245 = scalar_select %p244, %s19, 1
        %s246 = smul.addr %s245, 4
        %s247 = scalar_lea.vmem %s1, %s246
        %p248 = scmp.lt.s32.totalorder %s19, 1
        %s249 = scalar_select %p248, %s19, 1
        %s250 = scalar_lea.vmem %s4, %s249
        %v252 = vld [vmem:[%s243] sm:$0xf]
        %v253 = vld [vmem:[%s247] sm:$0xf]
        %v254 = vld [vmem:[%s2] sm:$0xf]
        %v255 = vld [vmem:[%s2 + $0x4] sm:$0xf]
        %v256 = vld [vmem:[%s2 + $0x8] sm:$0xf]
        %v257 = vld [vmem:[%s2 + $0xc] sm:$0xf]
        %v262 = vunpack.c.l.b16 %v254
        %v263 = vunpack.c.l.b16 %v255
        %v264 = vunpack.c.l.b16 %v256
        %v265 = vunpack.c.l.b16 %v257
        %v266 = vpack.c.b16 %v263, %v262
        %v267 = vpack.c.b16 %v265, %v264
        %vm270 = vcmask 261120
        %v272 = vsel %vm270, %v252, 0
        %274 = vmatprep.subr.bf16.mxu0 0
        %275 = vmatpush1.bf16.msra.mxu0 %v266
        %276 = vmatprep.subr.bf16.mxu0 0
        %277 = vmatpush1.bf16.msra.mxu0 %v267
        %278 = vmatprep.subr.bf16.mxu0 0
        %279 = vmatpush1.bf16.msra.mxu0 0
        %280 = vmatprep.subr.bf16.mxu0 0
        %281 = vmatpush1.bf16.msra.mxu0 0
        %282 = vmatprep.subr.bf16.mxu0 0
        %283 = vmatpush1.bf16.msra.mxu0 0
        %284 = vmatprep.subr.bf16.mxu0 0
        %285 = vmatpush1.bf16.msra.mxu0 0
        %286 = vmatprep.subr.bf16.mxu0 0
        %287 = vmatpush1.bf16.msra.mxu0 0
        %288 = vmatprep.subr.bf16.mxu0 0
        %289 = vmatpush1.bf16.msra.mxu0 0
        %290 = vmatprep.subr.bf16.mxu0 0
        %291 = vmatpush1.bf16.msra.mxu0 0
        %292 = vmatprep.subr.bf16.mxu0 0
        %293 = vmatpush1.bf16.msra.mxu0 0
        %294 = vmatprep.subr.bf16.mxu0 0
        %295 = vmatpush1.bf16.msra.mxu0 0
        %296 = vmatprep.subr.bf16.mxu0 0
        %297 = vmatpush1.bf16.msra.mxu0 0
        %298 = vmatprep.subr.bf16.mxu0 0
        %299 = vmatpush1.bf16.msra.mxu0 0
        %300 = vmatprep.subr.bf16.mxu0 0
        %301 = vmatpush1.bf16.msra.mxu0 0
        %302 = vmatprep.subr.bf16.mxu0 0
        %303 = vmatpush1.bf16.msra.mxu0 0
        %304 = vmatprep.subr.bf16.mxu0 0
        %305 = vmatpush1.bf16.msra.mxu0 0
        %306 = vmatprep.mubr.bf16.mxu0 0
        %307 = vmatmul.mubr.bf16.gmra.mrb[0].mxu0 %v272
        %v308 = vpop.f32.mrb[0].mxu0
        %v309 = vadd.f32 0.0, %v308
        %v310 = vpop.f32.mrb[0].mxu0
        %v311 = vpop.f32.mrb[0].mxu0
        %v312 = vpop.f32.mrb[0].mxu0
        %313 = vdwg.mxu0
        %v314 = vld [vmem:[%s3] sm:$0xf]
        %v315 = vld [vmem:[%s3 + $0x4] sm:$0xf]
        %v316 = vld [vmem:[%s3 + $0x8] sm:$0xf]
        %v317 = vld [vmem:[%s3 + $0xc] sm:$0xf]
        %v322 = vunpack.c.l.b16 %v314
        %v323 = vunpack.c.l.b16 %v315
        %v324 = vunpack.c.l.b16 %v316
        %v325 = vunpack.c.l.b16 %v317
        %v326 = vpack.c.b16 %v323, %v322
        %v327 = vpack.c.b16 %v325, %v324
        %v331 = vsel %vm270, %v253, 0
        %333 = vmatprep.subr.bf16.mxu0 0
        %334 = vmatpush1.bf16.msra.mxu0 %v326
        %335 = vmatprep.subr.bf16.mxu0 0
        %336 = vmatpush1.bf16.msra.mxu0 %v327
        %337 = vmatprep.subr.bf16.mxu0 0
        %338 = vmatpush1.bf16.msra.mxu0 0
        %339 = vmatprep.subr.bf16.mxu0 0
        %340 = vmatpush1.bf16.msra.mxu0 0
        %341 = vmatprep.subr.bf16.mxu0 0
        %342 = vmatpush1.bf16.msra.mxu0 0
        %343 = vmatprep.subr.bf16.mxu0 0
        %344 = vmatpush1.bf16.msra.mxu0 0
        %345 = vmatprep.subr.bf16.mxu0 0
        %346 = vmatpush1.bf16.msra.mxu0 0
        %347 = vmatprep.subr.bf16.mxu0 0
        %348 = vmatpush1.bf16.msra.mxu0 0
        %349 = vmatprep.subr.bf16.mxu0 0
        %350 = vmatpush1.bf16.msra.mxu0 0
        %351 = vmatprep.subr.bf16.mxu0 0
        %352 = vmatpush1.bf16.msra.mxu0 0
        %353 = vmatprep.subr.bf16.mxu0 0
        %354 = vmatpush1.bf16.msra.mxu0 0
        %355 = vmatprep.subr.bf16.mxu0 0
        %356 = vmatpush1.bf16.msra.mxu0 0
        %357 = vmatprep.subr.bf16.mxu0 0
        %358 = vmatpush1.bf16.msra.mxu0 0
        %359 = vmatprep.subr.bf16.mxu0 0
        %360 = vmatpush1.bf16.msra.mxu0 0
        %361 = vmatprep.subr.bf16.mxu0 0
        %362 = vmatpush1.bf16.msra.mxu0 0
        %363 = vmatprep.subr.bf16.mxu0 0
        %364 = vmatpush1.bf16.msra.mxu0 0
        %365 = vmatprep.mubr.bf16.mxu0 0
        %366 = vmatmul.mubr.bf16.gmra.mrb[0].mxu0 %v331
        %v367 = vpop.f32.mrb[0].mxu0
        %v368 = vadd.f32 0.0, %v367
        %v369 = vpop.f32.mrb[0].mxu0
        %v370 = vpop.f32.mrb[0].mxu0
        %v371 = vpop.f32.mrb[0].mxu0
        %372 = vdwg.mxu0
        %v373 = vld [vmem:[%s250] sm:$0x1]
        %v374 = vpack.c.bf16 %v309, %v309
        %v375 = vpack.c.bf16 %v368, %v368
        %v377 = vlaneseq
        %v378 = vshrl.u32 %v377, 7
        %v379 = vsub.s32 0, %v378
        %v380 = vrot.slane %v373, %v379
        %vm382 = vcmask 64512
        %v384 = vsel %vm382, %v374, 0
        %v387 = vsel %vm382, %v375, 0
        %389 = vmatprep.subr.bf16.mxu0 0
        %390 = vmatpush1.bf16.xpose.msra.mxu0 %v387
        %391 = vmatprep.subr.bf16.mxu0 0
        %392 = vmatpush1.bf16.xpose.msra.mxu0 0
        %393 = vmatprep.subr.bf16.mxu0 0
        %394 = vmatpush1.bf16.xpose.msra.mxu0 0
        %395 = vmatprep.subr.bf16.mxu0 0
        %396 = vmatpush1.bf16.xpose.msra.mxu0 0
        %397 = vmatprep.subr.bf16.mxu0 0
        %398 = vmatpush1.bf16.xpose.msra.mxu0 0
        %399 = vmatprep.subr.bf16.mxu0 0
        %400 = vmatpush1.bf16.xpose.msra.mxu0 0
        %401 = vmatprep.subr.bf16.mxu0 0
        %402 = vmatpush1.bf16.xpose.msra.mxu0 0
        %403 = vmatprep.subr.bf16.mxu0 0
        %404 = vmatpush1.bf16.xpose.msra.mxu0 0
        %405 = vmatprep.subr.bf16.mxu0 0
        %406 = vmatpush1.bf16.xpose.msra.mxu0 0
        %407 = vmatprep.subr.bf16.mxu0 0
        %408 = vmatpush1.bf16.xpose.msra.mxu0 0
        %409 = vmatprep.subr.bf16.mxu0 0
        %410 = vmatpush1.bf16.xpose.msra.mxu0 0
        %411 = vmatprep.subr.bf16.mxu0 0
        %412 = vmatpush1.bf16.xpose.msra.mxu0 0
        %413 = vmatprep.subr.bf16.mxu0 0
        %414 = vmatpush1.bf16.xpose.msra.mxu0 0
        %415 = vmatprep.subr.bf16.mxu0 0
        %416 = vmatpush1.bf16.xpose.msra.mxu0 0
        %417 = vmatprep.subr.bf16.mxu0 0
        %418 = vmatpush1.bf16.xpose.msra.mxu0 0
        %419 = vmatprep.subr.bf16.mxu0 0
        %420 = vmatpush1.bf16.xpose.msra.mxu0 0
        %421 = vmatprep.mubr.bf16.mxu0 0
        %422 = vmatmul.mubr.bf16.gmra.mrb[0].mxu0 %v384
        %v423 = vpop.f32.mrb[0].mxu0
        %v424 = vadd.f32 %v380, %v423
        %v425 = vpop.f32.mrb[0].mxu0
        %v426 = vpop.f32.mrb[0].mxu0
        %v427 = vpop.f32.mrb[0].mxu0
        %428 = vdwg.mxu0
        %v429 = vsel %vm382, %v424, -inf
        %430 = vmax.xlane.f32.xlu0 %v429
        %v431 = vpop.xlane.xlu0 %430
        %v432 = vsub.f32 %v424, %v431
        %v433 = vmul.f32 %v432, 1.442695
        %v434 = vpow.pop %v433
        %v435 = vsel %vm382, %v434, 0.0
        %436 = vadd.xlane.f32.xlu0 %v435
        %v437 = vpop.xlane.xlu0 %436
        %v438 = vrcp.pop %v437
        %v439 = vmul.f32 %v434, %v438
        %v440 = vpack.c.bf16 %v439, %v439
        %442 = vrot.lane.b32.xlu0 %v375, 96
        %v443 = vpop.permute.xlu0 %442
        %v445 = vsel %vm382, %v440, 0
        %vm447 = vcmask 1043456
        %v449 = vsel %vm447, %v443, 0
        %451 = vmatprep.subr.bf16.mxu0 0
        %452 = vmatpush1.bf16.msra.mxu0 %v449
        %453 = vmatprep.subr.bf16.mxu0 0
        %454 = vmatpush1.bf16.msra.mxu0 0
        %455 = vmatprep.subr.bf16.mxu0 0
        %456 = vmatpush1.bf16.msra.mxu0 0
        %457 = vmatprep.subr.bf16.mxu0 0
        %458 = vmatpush1.bf16.msra.mxu0 0
        %459 = vmatprep.subr.bf16.mxu0 0
        %460 = vmatpush1.bf16.msra.mxu0 0
        %461 = vmatprep.subr.bf16.mxu0 0
        %462 = vmatpush1.bf16.msra.mxu0 0
        %463 = vmatprep.subr.bf16.mxu0 0
        %464 = vmatpush1.bf16.msra.mxu0 0
        %465 = vmatprep.subr.bf16.mxu0 0
        %466 = vmatpush1.bf16.msra.mxu0 0
        %467 = vmatprep.subr.bf16.mxu0 0
        %468 = vmatpush1.bf16.msra.mxu0 0
        %469 = vmatprep.subr.bf16.mxu0 0
        %470 = vmatpush1.bf16.msra.mxu0 0
        %471 = vmatprep.subr.bf16.mxu0 0
        %472 = vmatpush1.bf16.msra.mxu0 0
        %473 = vmatprep.subr.bf16.mxu0 0
        %474 = vmatpush1.bf16.msra.mxu0 0
        %475 = vmatprep.subr.bf16.mxu0 0
        %476 = vmatpush1.bf16.msra.mxu0 0
        %477 = vmatprep.subr.bf16.mxu0 0
        %478 = vmatpush1.bf16.msra.mxu0 0
        %479 = vmatprep.subr.bf16.mxu0 0
        %480 = vmatpush1.bf16.msra.mxu0 0
        %481 = vmatprep.subr.bf16.mxu0 0
        %482 = vmatpush1.bf16.msra.mxu0 0
        %483 = vmatprep.mubr.bf16.mxu0 0
        %484 = vmatmul.mubr.bf16.gmra.mrb[0].mxu0 %v445
        %v485 = vpop.f32.mrb[0].mxu0
        %v486 = vadd.f32 0.0, %v485
        %v487 = vpop.f32.mrb[0].mxu0
        %v488 = vpop.f32.mrb[0].mxu0
        %v489 = vpop.f32.mrb[0].mxu0
        %490 = vdwg.mxu0
        %492 = vrot.lane.b32.xlu0 %v374, 120
        %v493 = vpop.permute.xlu0 %492
        %494 = vrot.lane.b32.xlu0 %v375, 120
        %v495 = vpop.permute.xlu0 %494
        %v497 = vsel %vm382, %v493, 0
        %v500 = vsel %vm382, %v495, 0
        %502 = vmatprep.subr.bf16.mxu0 0
        %503 = vmatpush1.bf16.xpose.msra.mxu0 %v500
        %504 = vmatprep.subr.bf16.mxu0 0
        %505 = vmatpush1.bf16.xpose.msra.mxu0 0
        %506 = vmatprep.subr.bf16.mxu0 0
        %507 = vmatpush1.bf16.xpose.msra.mxu0 0
        %508 = vmatprep.subr.bf16.mxu0 0
        %509 = vmatpush1.bf16.xpose.msra.mxu0 0
        %510 = vmatprep.subr.bf16.mxu0 0
        %511 = vmatpush1.bf16.xpose.msra.mxu0 0
        %512 = vmatprep.subr.bf16.mxu0 0
        %513 = vmatpush1.bf16.xpose.msra.mxu0 0
        %514 = vmatprep.subr.bf16.mxu0 0
        %515 = vmatpush1.bf16.xpose.msra.mxu0 0
        %516 = vmatprep.subr.bf16.mxu0 0
        %517 = vmatpush1.bf16.xpose.msra.mxu0 0
        %518 = vmatprep.subr.bf16.mxu0 0
        %519 = vmatpush1.bf16.xpose.msra.mxu0 0
        %520 = vmatprep.subr.bf16.mxu0 0
        %521 = vmatpush1.bf16.xpose.msra.mxu0 0
        %522 = vmatprep.subr.bf16.mxu0 0
        %523 = vmatpush1.bf16.xpose.msra.mxu0 0
        %524 = vmatprep.subr.bf16.mxu0 0
        %525 = vmatpush1.bf16.xpose.msra.mxu0 0
        %526 = vmatprep.subr.bf16.mxu0 0
        %527 = vmatpush1.bf16.xpose.msra.mxu0 0
        %528 = vmatprep.subr.bf16.mxu0 0
        %529 = vmatpush1.bf16.xpose.msra.mxu0 0
        %530 = vmatprep.subr.bf16.mxu0 0
        %531 = vmatpush1.bf16.xpose.msra.mxu0 0
        %532 = vmatprep.subr.bf16.mxu0 0
        %533 = vmatpush1.bf16.xpose.msra.mxu0 0
        %534 = vmatprep.mubr.bf16.mxu0 0
        %535 = vmatmul.mubr.bf16.gmra.mrb[0].mxu0 %v497
        %v536 = vpop.f32.mrb[0].mxu0
        %v537 = vadd.f32 %v380, %v536
        %v538 = vpop.f32.mrb[0].mxu0
        %v539 = vpop.f32.mrb[0].mxu0
        %v540 = vpop.f32.mrb[0].mxu0
        %541 = vdwg.mxu0
        %v542 = vsel %vm382, %v537, -inf
        %543 = vmax.xlane.f32.xlu0 %v542
        %v544 = vpop.xlane.xlu0 %543
        %v545 = vsub.f32 %v537, %v544
        %v546 = vmul.f32 %v545, 1.442695
        %v547 = vpow.pop %v546
        %v548 = vsel %vm382, %v547, 0.0
        %549 = vadd.xlane.f32.xlu0 %v548
        %v550 = vpop.xlane.xlu0 %549
        %v551 = vrcp.pop %v550
        %v552 = vmul.f32 %v547, %v551
        %v553 = vpack.c.bf16 %v552, %v552
        %554 = vrot.lane.b32.xlu0 %v375, 88
        %v555 = vpop.permute.xlu0 %554
        %v557 = vsel %vm382, %v553, 0
        %v560 = vsel %vm447, %v555, 0
        %562 = vmatprep.subr.bf16.mxu0 0
        %563 = vmatpush1.bf16.msra.mxu0 %v560
        %564 = vmatprep.subr.bf16.mxu0 0
        %565 = vmatpush1.bf16.msra.mxu0 0
        %566 = vmatprep.subr.bf16.mxu0 0
        %567 = vmatpush1.bf16.msra.mxu0 0
        %568 = vmatprep.subr.bf16.mxu0 0
        %569 = vmatpush1.bf16.msra.mxu0 0
        %570 = vmatprep.subr.bf16.mxu0 0
        %571 = vmatpush1.bf16.msra.mxu0 0
        %572 = vmatprep.subr.bf16.mxu0 0
        %573 = vmatpush1.bf16.msra.mxu0 0
        %574 = vmatprep.subr.bf16.mxu0 0
        %575 = vmatpush1.bf16.msra.mxu0 0
        %576 = vmatprep.subr.bf16.mxu0 0
        %577 = vmatpush1.bf16.msra.mxu0 0
        %578 = vmatprep.subr.bf16.mxu0 0
        %579 = vmatpush1.bf16.msra.mxu0 0
        %580 = vmatprep.subr.bf16.mxu0 0
        %581 = vmatpush1.bf16.msra.mxu0 0
        %582 = vmatprep.subr.bf16.mxu0 0
        %583 = vmatpush1.bf16.msra.mxu0 0
        %584 = vmatprep.subr.bf16.mxu0 0
        %585 = vmatpush1.bf16.msra.mxu0 0
        %586 = vmatprep.subr.bf16.mxu0 0
        %587 = vmatpush1.bf16.msra.mxu0 0
        %588 = vmatprep.subr.bf16.mxu0 0
        %589 = vmatpush1.bf16.msra.mxu0 0
        %590 = vmatprep.subr.bf16.mxu0 0
        %591 = vmatpush1.bf16.msra.mxu0 0
        %592 = vmatprep.subr.bf16.mxu0 0
        %593 = vmatpush1.bf16.msra.mxu0 0
        %594 = vmatprep.mubr.bf16.mxu0 0
        %595 = vmatmul.mubr.bf16.gmra.mrb[0].mxu0 %v557
        %v596 = vpop.f32.mrb[0].mxu0
        %v597 = vadd.f32 0.0, %v596
        %v598 = vpop.f32.mrb[0].mxu0
        %v599 = vpop.f32.mrb[0].mxu0
        %v600 = vpop.f32.mrb[0].mxu0
        %601 = vdwg.mxu0
        %602 = vrot.lane.b32.xlu0 %v374, 112
        %v603 = vpop.permute.xlu0 %602
        %604 = vrot.lane.b32.xlu0 %v375, 112
        %v605 = vpop.permute.xlu0 %604
        %v607 = vsel %vm382, %v603, 0
        %v610 = vsel %vm382, %v605, 0
        %612 = vmatprep.subr.bf16.mxu0 0
        %613 = vmatpush1.bf16.xpose.msra.mxu0 %v610
        %614 = vmatprep.subr.bf16.mxu0 0
        %615 = vmatpush1.bf16.xpose.msra.mxu0 0
        %616 = vmatprep.subr.bf16.mxu0 0
        %617 = vmatpush1.bf16.xpose.msra.mxu0 0
        %618 = vmatprep.subr.bf16.mxu0 0
        %619 = vmatpush1.bf16.xpose.msra.mxu0 0
        %620 = vmatprep.subr.bf16.mxu0 0
        %621 = vmatpush1.bf16.xpose.msra.mxu0 0
        %622 = vmatprep.subr.bf16.mxu0 0
        %623 = vmatpush1.bf16.xpose.msra.mxu0 0
        %624 = vmatprep.subr.bf16.mxu0 0
        %625 = vmatpush1.bf16.xpose.msra.mxu0 0
        %626 = vmatprep.subr.bf16.mxu0 0
        %627 = vmatpush1.bf16.xpose.msra.mxu0 0
        %628 = vmatprep.subr.bf16.mxu0 0
        %629 = vmatpush1.bf16.xpose.msra.mxu0 0
        %630 = vmatprep.subr.bf16.mxu0 0
        %631 = vmatpush1.bf16.xpose.msra.mxu0 0
        %632 = vmatprep.subr.bf16.mxu0 0
        %633 = vmatpush1.bf16.xpose.msra.mxu0 0
        %634 = vmatprep.subr.bf16.mxu0 0
        %635 = vmatpush1.bf16.xpose.msra.mxu0 0
        %636 = vmatprep.subr.bf16.mxu0 0
        %637 = vmatpush1.bf16.xpose.msra.mxu0 0
        %638 = vmatprep.subr.bf16.mxu0 0
        %639 = vmatpush1.bf16.xpose.msra.mxu0 0
        %640 = vmatprep.subr.bf16.mxu0 0
        %641 = vmatpush1.bf16.xpose.msra.mxu0 0
        %642 = vmatprep.subr.bf16.mxu0 0
        %643 = vmatpush1.bf16.xpose.msra.mxu0 0
        %644 = vmatprep.mubr.bf16.mxu0 0
        %645 = vmatmul.mubr.bf16.gmra.mrb[0].mxu0 %v607
        %v646 = vpop.f32.mrb[0].mxu0
        %v647 = vadd.f32 %v380, %v646
        %v648 = vpop.f32.mrb[0].mxu0
        %v649 = vpop.f32.mrb[0].mxu0
        %v650 = vpop.f32.mrb[0].mxu0
        %651 = vdwg.mxu0
        %v652 = vsel %vm382, %v647, -inf
        %653 = vmax.xlane.f32.xlu0 %v652
        %v654 = vpop.xlane.xlu0 %653
        %v655 = vsub.f32 %v647, %v654
        %v656 = vmul.f32 %v655, 1.442695
        %v657 = vpow.pop %v656
        %v658 = vsel %vm382, %v657, 0.0
        %659 = vadd.xlane.f32.xlu0 %v658
        %v660 = vpop.xlane.xlu0 %659
        %v661 = vrcp.pop %v660
        %v662 = vmul.f32 %v657, %v661
        %v663 = vpack.c.bf16 %v662, %v662
        %664 = vrot.lane.b32.xlu0 %v375, 80
        %v665 = vpop.permute.xlu0 %664
        %v667 = vsel %vm382, %v663, 0
        %v670 = vsel %vm447, %v665, 0
        %672 = vmatprep.subr.bf16.mxu0 0
        %673 = vmatpush1.bf16.msra.mxu0 %v670
        %674 = vmatprep.subr.bf16.mxu0 0
        %675 = vmatpush1.bf16.msra.mxu0 0
        %676 = vmatprep.subr.bf16.mxu0 0
        %677 = vmatpush1.bf16.msra.mxu0 0
        %678 = vmatprep.subr.bf16.mxu0 0
        %679 = vmatpush1.bf16.msra.mxu0 0
        %680 = vmatprep.subr.bf16.mxu0 0
        %681 = vmatpush1.bf16.msra.mxu0 0
        %682 = vmatprep.subr.bf16.mxu0 0
        %683 = vmatpush1.bf16.msra.mxu0 0
        %684 = vmatprep.subr.bf16.mxu0 0
        %685 = vmatpush1.bf16.msra.mxu0 0
        %686 = vmatprep.subr.bf16.mxu0 0
        %687 = vmatpush1.bf16.msra.mxu0 0
        %688 = vmatprep.subr.bf16.mxu0 0
        %689 = vmatpush1.bf16.msra.mxu0 0
        %690 = vmatprep.subr.bf16.mxu0 0
        %691 = vmatpush1.bf16.msra.mxu0 0
        %692 = vmatprep.subr.bf16.mxu0 0
        %693 = vmatpush1.bf16.msra.mxu0 0
        %694 = vmatprep.subr.bf16.mxu0 0
        %695 = vmatpush1.bf16.msra.mxu0 0
        %696 = vmatprep.subr.bf16.mxu0 0
        %697 = vmatpush1.bf16.msra.mxu0 0
        %698 = vmatprep.subr.bf16.mxu0 0
        %699 = vmatpush1.bf16.msra.mxu0 0
        %700 = vmatprep.subr.bf16.mxu0 0
        %701 = vmatpush1.bf16.msra.mxu0 0
        %702 = vmatprep.subr.bf16.mxu0 0
        %703 = vmatpush1.bf16.msra.mxu0 0
        %704 = vmatprep.mubr.bf16.mxu0 0
        %705 = vmatmul.mubr.bf16.gmra.mrb[0].mxu0 %v667
        %v706 = vpop.f32.mrb[0].mxu0
        %v707 = vadd.f32 0.0, %v706
        %v708 = vpop.f32.mrb[0].mxu0
        %v709 = vpop.f32.mrb[0].mxu0
        %v710 = vpop.f32.mrb[0].mxu0
        %711 = vdwg.mxu0
        %712 = vrot.lane.b32.xlu0 %v374, 104
        %v713 = vpop.permute.xlu0 %712
        %714 = vrot.lane.b32.xlu0 %v375, 104
        %v715 = vpop.permute.xlu0 %714
        %v717 = vsel %vm382, %v713, 0
        %v720 = vsel %vm382, %v715, 0
        %722 = vmatprep.subr.bf16.mxu0 0
        %723 = vmatpush1.bf16.xpose.msra.mxu0 %v720
        %724 = vmatprep.subr.bf16.mxu0 0
        %725 = vmatpush1.bf16.xpose.msra.mxu0 0
        %726 = vmatprep.subr.bf16.mxu0 0
        %727 = vmatpush1.bf16.xpose.msra.mxu0 0
        %728 = vmatprep.subr.bf16.mxu0 0
        %729 = vmatpush1.bf16.xpose.msra.mxu0 0
        %730 = vmatprep.subr.bf16.mxu0 0
        %731 = vmatpush1.bf16.xpose.msra.mxu0 0
        %732 = vmatprep.subr.bf16.mxu0 0
        %733 = vmatpush1.bf16.xpose.msra.mxu0 0
        %734 = vmatprep.subr.bf16.mxu0 0
        %735 = vmatpush1.bf16.xpose.msra.mxu0 0
        %736 = vmatprep.subr.bf16.mxu0 0
        %737 = vmatpush1.bf16.xpose.msra.mxu0 0
        %738 = vmatprep.subr.bf16.mxu0 0
        %739 = vmatpush1.bf16.xpose.msra.mxu0 0
        %740 = vmatprep.subr.bf16.mxu0 0
        %741 = vmatpush1.bf16.xpose.msra.mxu0 0
        %742 = vmatprep.subr.bf16.mxu0 0
        %743 = vmatpush1.bf16.xpose.msra.mxu0 0
        %744 = vmatprep.subr.bf16.mxu0 0
        %745 = vmatpush1.bf16.xpose.msra.mxu0 0
        %746 = vmatprep.subr.bf16.mxu0 0
        %747 = vmatpush1.bf16.xpose.msra.mxu0 0
        %748 = vmatprep.subr.bf16.mxu0 0
        %749 = vmatpush1.bf16.xpose.msra.mxu0 0
        %750 = vmatprep.subr.bf16.mxu0 0
        %751 = vmatpush1.bf16.xpose.msra.mxu0 0
        %752 = vmatprep.subr.bf16.mxu0 0
        %753 = vmatpush1.bf16.xpose.msra.mxu0 0
        %754 = vmatprep.mubr.bf16.mxu0 0
        %755 = vmatmul.mubr.bf16.gmra.mrb[0].mxu0 %v717
        %v756 = vpop.f32.mrb[0].mxu0
        %v757 = vadd.f32 %v380, %v756
        %v758 = vpop.f32.mrb[0].mxu0
        %v759 = vpop.f32.mrb[0].mxu0
        %v760 = vpop.f32.mrb[0].mxu0
        %761 = vdwg.mxu0
        %v762 = vsel %vm382, %v757, -inf
        %763 = vmax.xlane.f32.xlu0 %v762
        %v764 = vpop.xlane.xlu0 %763
        %v765 = vsub.f32 %v757, %v764
        %v766 = vmul.f32 %v765, 1.442695
        %v767 = vpow.pop %v766
        %v768 = vsel %vm382, %v767, 0.0
        %769 = vadd.xlane.f32.xlu0 %v768
        %v770 = vpop.xlane.xlu0 %769
        %v771 = vrcp.pop %v770
        %v772 = vmul.f32 %v767, %v771
        %v773 = vpack.c.bf16 %v772, %v772
        %774 = vrot.lane.b32.xlu0 %v375, 72
        %v775 = vpop.permute.xlu0 %774
        %v777 = vsel %vm382, %v773, 0
        %v780 = vsel %vm447, %v775, 0
        %782 = vmatprep.subr.bf16.mxu0 0
        %783 = vmatpush1.bf16.msra.mxu0 %v780
        %784 = vmatprep.subr.bf16.mxu0 0
        %785 = vmatpush1.bf16.msra.mxu0 0
        %786 = vmatprep.subr.bf16.mxu0 0
        %787 = vmatpush1.bf16.msra.mxu0 0
        %788 = vmatprep.subr.bf16.mxu0 0
        %789 = vmatpush1.bf16.msra.mxu0 0
        %790 = vmatprep.subr.bf16.mxu0 0
        %791 = vmatpush1.bf16.msra.mxu0 0
        %792 = vmatprep.subr.bf16.mxu0 0
        %793 = vmatpush1.bf16.msra.mxu0 0
        %794 = vmatprep.subr.bf16.mxu0 0
        %795 = vmatpush1.bf16.msra.mxu0 0
        %796 = vmatprep.subr.bf16.mxu0 0
        %797 = vmatpush1.bf16.msra.mxu0 0
        %798 = vmatprep.subr.bf16.mxu0 0
        %799 = vmatpush1.bf16.msra.mxu0 0
        %800 = vmatprep.subr.bf16.mxu0 0
        %801 = vmatpush1.bf16.msra.mxu0 0
        %802 = vmatprep.subr.bf16.mxu0 0
        %803 = vmatpush1.bf16.msra.mxu0 0
        %804 = vmatprep.subr.bf16.mxu0 0
        %805 = vmatpush1.bf16.msra.mxu0 0
        %806 = vmatprep.subr.bf16.mxu0 0
        %807 = vmatpush1.bf16.msra.mxu0 0
        %808 = vmatprep.subr.bf16.mxu0 0
        %809 = vmatpush1.bf16.msra.mxu0 0
        %810 = vmatprep.subr.bf16.mxu0 0
        %811 = vmatpush1.bf16.msra.mxu0 0
        %812 = vmatprep.subr.bf16.mxu0 0
        %813 = vmatpush1.bf16.msra.mxu0 0
        %814 = vmatprep.mubr.bf16.mxu0 0
        %815 = vmatmul.mubr.bf16.gmra.mrb[0].mxu0 %v777
        %v816 = vpop.f32.mrb[0].mxu0
        %v817 = vadd.f32 0.0, %v816
        %v818 = vpop.f32.mrb[0].mxu0
        %v819 = vpop.f32.mrb[0].mxu0
        %v820 = vpop.f32.mrb[0].mxu0
        %821 = vdwg.mxu0
        %823 = vrot.lane.b32.xlu0 %v597, 8
        %v824 = vpop.permute.xlu0 %823
        %827 = vrot.lane.b32.xlu0 %v707, 16
        %v828 = vpop.permute.xlu0 %827
        %831 = vrot.lane.b32.xlu0 %v817, 24
        %v832 = vpop.permute.xlu0 %831
        %v834 = vsel %vm382, %v486, %v824
        %vm835 = vcmask 130048
        %v836 = vsel %vm835, %v834, %v828
        %vm837 = vcmask 195584
        %v838 = vsel %vm837, %v836, %v832
        %839 = vst.msk [vmem:[%s239] sm:$0xff] %vm270, %v838
        %s840 = sand.u32 %s147, 1
        %s841 = scalar_lea.sflag [#allocation3], %s840
        %s842 = sand.u32 %s147, 1
        %s843 = smul.addr %s842, 8
        %s844 = scalar_lea.vmem [#allocation2], %s843
        // Predicated region
        $region41: #{msa_forward.1} parent=39 // pred_check
          %p845 = pneg %p157
        $region42: #{msa_forward.1} parent=39 // pred_check_branch
          %847 = sbr.rel (%p845) target = $region44
        $region43: #{msa_forward.1} parent=39 // pred_region
          %s849 = ssub.s32 128, 128
          %850 = vsyncadd %s841, %s849
          %s851 = smul.addr %s19, 128
          %s852 = scalar_lea.hbm %s5, %s851
          %s854 = sshll.u32 %s844, 4
          %s855 = int_to_ptr.vmem [resolvable:$true] %s854
          %857 = dma.vmem_to_hbm [thread:$0]  %s855, 128, %s852, %s841
        $region44: #{msa_forward.1} parent=39 // pred_fallthru
          _
      $region40: #{msa_forward.1} parent=5 // pred_fallthru
        _
      %p858 = scmp.le.s32.totalorder 2, %s14
      // Predicated region
      $region45: #{msa_forward.1} parent=5 // pred_check
        %p859 = pneg %p858
      $region46: #{msa_forward.1} parent=5 // pred_check_branch
        %861 = sbr.rel (%p859) target = $region48
      $region47: #{msa_forward.1} parent=5 // pred_region
        %s862 = ssub.s32 %s14, 2
        // Predicated region
        $region49: #{msa_forward.1} parent=47 // pred_check
          %p863 = pneg %p163
        $region50: #{msa_forward.1} parent=47 // pred_check_branch
          %865 = sbr.rel (%p863) target = $region52
        $region51: #{msa_forward.1} parent=47 // pred_region
          %s866 = sand.u32 %s148, 1
          %s867 = scalar_lea.sflag [#allocation3], %s866
          %s868 = sand.u32 %s148, 1
          %s869 = smul.addr %s868, 8
          %s870 = scalar_lea.vmem [#allocation2], %s869
          %871 = dma.done %s867, 128
        $region52: #{msa_forward.1} parent=47 // pred_fallthru
          _
      $region48: #{msa_forward.1} parent=5 // pred_fallthru
        _
    $region6: #{msa_forward.1} parent=1 // loop_footer
      %s18 = sadd.s32 1, %s14
    $region7: #{msa_forward.1} parent=1 // loop_footer_branch
      %13 = sbr.rel target = $region3
    $region8: #{msa_forward.1} parent=1 // loop_exit
      _
    %872 = vsyncpa [#allocation3], 1
    %s873 = scalar_lea.sflag [#allocation3], 1
    %874 = vsyncpa %s873, 1

</llo_original>
